<compile_context>
chip_gen: v7x
topology: tpu7x:2x2x1
jax: 0.10.0
libtpu: 0.0.40
codegen_flags: <defaults>
</compile_context>

<pallas_src>
import functools

import jax
import jax.numpy as jnp
from jax.experimental import pallas as pl
from jax.experimental.pallas import tpu as pltpu


def _round_up(x, m):
    return ((x + m - 1) // m) * m


def bigram_cell_kernel(x_ref, w_ref, b_ref, o_ref, *, nonlin, h_valid, h_tile):
    # x_ref : (TB, D_in)  input batch tile (native dtype: f32 or bf16)
    # w_ref : (D_in, TH)  pre-transposed, column-padded weight tile
    # b_ref : (1, TH)     f32 bias tile (zero-padded)
    # o_ref : (TB, TH)    lane-dense output tile
    y = jnp.dot(x_ref[...], w_ref[...], preferred_element_type=jnp.float32)  # MXU, f32 acc
    y = y + b_ref[...].astype(jnp.float32)                                    # VPU (f32)
    if nonlin == "sigmoid":
        y = jax.nn.sigmoid(y)            # EUP logistic
    elif nonlin == "tanh":
        y = jnp.tanh(y)                  # EUP
    elif nonlin == "softmax":
        # Wrapper forces a single full-H tile for softmax; mask the zero-padded
        # lanes so they do not contaminate the max / denominator.
        if h_valid != h_tile:
            col = jax.lax.broadcasted_iota(jnp.int32, y.shape, 1)
            y = jnp.where(col < h_valid, y, -jnp.inf)
        y = y - jnp.max(y, axis=-1, keepdims=True)
        ey = jnp.exp(y)
        y = ey * pl.reciprocal(jnp.sum(ey, axis=-1, keepdims=True), approx=True)
    # else: identity (matches apply_nonlin fall-through)
    o_ref[...] = y.astype(o_ref.dtype)


def prepare_bigram_params(weight, bias, *, tile_h=1024, nonlin="sigmoid",
                          param_dtype=None):
    """One-time parameter prep (call once / let jit hoist it).

    weight : (H, D_in) nn.Linear weight; bias : (H,)
    Returns (w_t, b2, h_valid, th):
      w_t : (D_in, Hp) transposed weight, H zero-padded to a multiple of 128
            (lane-dense), optionally cast (e.g. bf16 to halve HBM traffic).
      b2  : (1, Hp) f32 bias, zero-padded.
      h_valid : original H;  th : hidden tile size used by the kernel.
    """
    H, D_in = weight.shape
    w_dtype = weight.dtype if param_dtype is None else param_dtype
    hp_min = _round_up(H, 128)                       # lane-dense output width
    if nonlin == "softmax":
        th = hp_min                                  # softmax needs full row per tile
    else:
        th = min(_round_up(tile_h, 128), hp_min)
    hp = _round_up(hp_min, th)                       # divisible by th
    w_t = jnp.pad(jnp.asarray(weight, w_dtype).T, ((0, 0), (0, hp - H)))   # (D_in, Hp)
    b2 = jnp.pad(jnp.asarray(bias, jnp.float32), (0, hp - H)).reshape(1, hp)
    return w_t, b2, H, th


def bigram_cell_apply(inp, w_t, b2, *, h_valid, tile_h, nonlin="sigmoid",
                      tile_b=512, out_dtype=None):
    """Run the kernel on prepared params. inp: (B, D_in) in its native dtype."""
    B, D_in = inp.shape
    Dw, Hp = w_t.shape
    assert Dw == D_in and Hp % tile_h == 0
    th = tile_h
    out_dtype = inp.dtype if out_dtype is None else out_dtype

    # Batch tiling: sublane-aligned (16 covers packed bf16/fp16, 8 for f32);
    # round the user tile too, so odd tile_b values never break lowering.
    sub = 16 if jnp.dtype(inp.dtype).itemsize < 4 else 8
    tb = min(_round_up(tile_b, sub), _round_up(B, sub))
    bp = _round_up(B, tb)
    x = inp if bp == B else jnp.pad(inp, ((0, bp - B), (0, 0)))  # tail-only pad, native dtype

    n_b, n_h = bp // tb, Hp // th
    grid = (n_b, n_h)

    # Explicit VMEM budget: double-buffered x / out / W / bias blocks + headroom,
    # clamped to the 64 MiB v7x envelope (tile H smaller if a config exceeds it).
    needed = 2 * (tb * D_in * x.dtype.itemsize
                  + D_in * th * w_t.dtype.itemsize
                  + tb * th * jnp.dtype(out_dtype).itemsize
                  + th * 4)
    vmem_limit = int(min(max(needed + (4 << 20), 16 << 20), 64 << 20))

    # Weight/bias have a constant index map when H fits one tile: keep a single
    # VMEM buffer for them (no point double-buffering something that never
    # changes).  Fall back silently if this build rejects pipeline_mode.
    def _spec(shape, index_map, single_buffer=False):
        if single_buffer:
            try:
                return pl.BlockSpec(shape, index_map, pipeline_mode=pl.Buffered(1))
            except Exception:
                pass
        return pl.BlockSpec(shape, index_map)

    const_wb = n_h == 1
    kernel = functools.partial(bigram_cell_kernel, nonlin=nonlin,
                               h_valid=h_valid, h_tile=th)
    out = pl.pallas_call(
        kernel,
        out_shape=jax.ShapeDtypeStruct((bp, Hp), out_dtype),
        grid=grid,
        in_specs=[
            pl.BlockSpec((tb, D_in), lambda i, j: (i, 0)),              # streamed x tile
            _spec((D_in, th), lambda i, j: (0, j), single_buffer=const_wb),  # weight
            _spec((1, th), lambda i, j: (0, j), single_buffer=const_wb),     # bias
        ],
        out_specs=pl.BlockSpec((tb, th), lambda i, j: (i, j)),          # lane-dense out
        compiler_params=pltpu.CompilerParams(
            dimension_semantics=("parallel", "parallel"),               # megacore on v7x
            vmem_limit_bytes=vmem_limit,
        ),
    )(x, w_t, b2)
    return out[:B, :h_valid]


def bigram_cell(inp, state, weight, bias, *, nonlin="sigmoid", tile_b=512,
                tile_h=1024, param_dtype=None, out_dtype=None):
    """BigramCell.forward.  `state` is overwritten by the module, so unused."""
    del state
    w_t, b2, h_valid, th = prepare_bigram_params(
        weight, bias, tile_h=tile_h, nonlin=nonlin, param_dtype=param_dtype)
    return bigram_cell_apply(inp, w_t, b2, h_valid=h_valid, tile_h=th,
                             nonlin=nonlin, tile_b=tile_b, out_dtype=out_dtype)


def bigram_cell_ref(inp, state, weight, bias, nonlin="sigmoid"):
    """Pure-JAX reference mirroring the PyTorch forward."""
    del state
    y = inp.astype(jnp.float32) @ weight.astype(jnp.float32).T + bias.astype(jnp.float32)
    if nonlin == "sigmoid":
        return jax.nn.sigmoid(y)
    if nonlin == "tanh":
        return jnp.tanh(y)
    if nonlin == "softmax":
        return jax.nn.softmax(y, axis=-1)
    return y


if __name__ == "__main__":
    B, D_IN, H = 8, 16, 32
    key = jax.random.PRNGKey(0)
    k1, k2, k3, k4 = jax.random.split(key, 4)

    # nn.Linear(D_IN, H) default init: uniform(-1/sqrt(D_IN), 1/sqrt(D_IN))
    bound = 1.0 / (D_IN ** 0.5)
    weight = jax.random.uniform(k1, (H, D_IN), jnp.float32, minval=-bound, maxval=bound)
    bias = jax.random.uniform(k2, (H,), jnp.float32, minval=-bound, maxval=bound)
    inp = jax.random.normal(k3, (B, D_IN), jnp.float32)
    state = jax.random.normal(k4, (B, H), jnp.float32)     # ignored by forward

    # 1) Default sigmoid, f32 streaming. Params prepared once, apply jitted
    #    (transpose/pad of W happens one time, not per call).
    w_t, b2, h_valid, th = prepare_bigram_params(weight, bias)
    fwd = jax.jit(functools.partial(bigram_cell_apply, h_valid=h_valid, tile_h=th))
    out = jax.block_until_ready(fwd(inp, w_t, b2))
    ref = bigram_cell_ref(inp, state, weight, bias)
    assert out.shape == (B, H)
    assert jnp.allclose(out, ref, atol=1e-5, rtol=1e-5), "sigmoid mismatch vs reference"

    # 2) Softmax: exercises the lane-dense H padding (32 -> 128) + column masking.
    out_sm = jax.block_until_ready(bigram_cell(inp, state, weight, bias, nonlin="softmax"))
    ref_sm = bigram_cell_ref(inp, state, weight, bias, nonlin="softmax")
    assert jnp.allclose(out_sm, ref_sm, atol=2e-3, rtol=2e-3), "softmax mismatch"

    # 3) bf16 streaming of x and W (halves HBM traffic); f32 accumulate in-kernel.
    out_bf = jax.block_until_ready(
        bigram_cell(inp.astype(jnp.bfloat16), state, weight, bias,
                    param_dtype=jnp.bfloat16, out_dtype=jnp.float32))
    assert jnp.allclose(out_bf, ref, atol=3e-2, rtol=3e-2), "bf16 mismatch"

    print("KERNEL_OK")
</pallas_src>

<mosaic_0001>
module attributes {stable_mosaic.version = 11 : i64} {
  func.func @bigram_cell_kernel(%arg0: i32, %arg1: i32, %arg2: memref<8x16xf32, #tpu.memory_space<vmem>>, %arg3: memref<16x128xf32, #tpu.memory_space<vmem>>, %arg4: memref<1x128xf32, #tpu.memory_space<vmem>>, %arg5: memref<8x128xf32, #tpu.memory_space<vmem>>) attributes {dimension_semantics = [#tpu.dimension_semantics<parallel>, #tpu.dimension_semantics<parallel>], iteration_bounds = array<i64: 1, 1>, scalar_prefetch = 0 : i64, scratch_operands = 0 : i64, tpu.core_type = #tpu.core_type<tc>, window_params = [{transform_indices = @transform_0, window_bounds = array<i64: 8, 16>}, {pipeline_mode = #tpu.pipeline_mode<synchronous>, transform_indices = @transform_1, window_bounds = array<i64: 16, 128>}, {pipeline_mode = #tpu.pipeline_mode<synchronous>, transform_indices = @transform_2, window_bounds = array<i64: 1, 128>}, {transform_indices = @transform_3, window_bounds = array<i64: 8, 128>}]} {
    %c0 = arith.constant 0 : index
    %c0_0 = arith.constant 0 : index
    %0 = vector.load %arg2[%c0, %c0_0] : memref<8x16xf32, #tpu.memory_space<vmem>>, vector<8x16xf32>
    %c0_1 = arith.constant 0 : index
    %c0_2 = arith.constant 0 : index
    %1 = vector.load %arg3[%c0_1, %c0_2] : memref<16x128xf32, #tpu.memory_space<vmem>>, vector<16x128xf32>
    %cst = arith.constant dense<0.000000e+00> : vector<8x128xf32>
    %2 = tpu.matmul %0, %1, %cst {dimension_numbers = #tpu.dot_dimension_numbers<[1], [0], [0], [1], [0, 0, 1, 1], [], []>} : vector<8x16xf32>, vector<16x128xf32>, vector<8x128xf32> -> vector<8x128xf32>
    %c0_3 = arith.constant 0 : index
    %c0_4 = arith.constant 0 : index
    %3 = vector.load %arg4[%c0_3, %c0_4] : memref<1x128xf32, #tpu.memory_space<vmem>>, vector<1x128xf32>
    %4 = vector.broadcast %3 : vector<1x128xf32> to vector<8x128xf32>
    %5 = arith.addf %2, %4 : vector<8x128xf32>
    %6 = arith.negf %5 : vector<8x128xf32>
    %7 = math.exp %6 : vector<8x128xf32>
    %cst_5 = arith.constant 1.000000e+00 : f32
    %8 = vector.broadcast %cst_5 : f32 to vector<8x128xf32>
    %9 = arith.addf %8, %7 : vector<8x128xf32>
    %10 = arith.divf %8, %9 : vector<8x128xf32>
    %c0_6 = arith.constant 0 : index
    %c0_7 = arith.constant 0 : index
    %11 = vector.load %arg5[%c0_6, %c0_7] : memref<8x128xf32, #tpu.memory_space<vmem>>, vector<8x128xf32>
    tpu.vector_store %arg5[%c0_6, %c0_7], %10 {strides = array<i32>} : memref<8x128xf32, #tpu.memory_space<vmem>>, vector<8x128xf32>,
    return
  }
  func.func @transform_0(%arg0: i32, %arg1: i32) -> (i32, i32) {
    %c0_i32 = arith.constant 0 : i32
    %c0_i32_0 = arith.constant 0 : i32
    return %arg0, %c0_i32 : i32, i32
  }
  func.func @transform_1(%arg0: i32, %arg1: i32) -> (i32, i32) {
    %c0_i32 = arith.constant 0 : i32
    %c0_i32_0 = arith.constant 0 : i32
    return %c0_i32, %arg1 : i32, i32
  }
  func.func @transform_2(%arg0: i32, %arg1: i32) -> (i32, i32) {
    %c0_i32 = arith.constant 0 : i32
    %c0_i32_0 = arith.constant 0 : i32
    return %c0_i32, %arg1 : i32, i32
  }
  func.func @transform_3(%arg0: i32, %arg1: i32) -> (i32, i32) {
    %c0_i32 = arith.constant 0 : i32
    return %arg0, %arg1 : i32, i32
  }
}

</mosaic_0001>

<llo_original>
// kernel: bigram_cell_apply.1
$region0: #{bigram_cell_apply.1}
  #allocation0 [shape = 'u32[]', space=smem, size = 0x4, offset = 0x4, fixed_abs, tag = 'smem constant byte address 0x4 - core index']
  #allocation1 [shape = 'u32[144,128]{1,0:T(1,128)}', space=vmem, size = 0x12000, scoped, tag = 'internal scratch']
  %s0 = inlined_call_operand.hbm [shape: f32[8,16], index: 0, kind: input, shape index: {}]
  %s1 = inlined_call_operand.hbm [shape: f32[16,128], index: 1, kind: input, shape index: {}]
  %s2 = inlined_call_operand.vmem [shape: f32[1,128], index: 2, kind: input, shape index: {}]
  %s3 = inlined_call_operand.hbm [shape: f32[8,128], index: 3, kind: output, shape index: {}]
  %s4 = sld [smem:[#allocation0]]
  $region30: #{bigram_cell_apply.1} parent=0
    _
  %s6 = ssub.s32 1, %s4
  %s7 = scalar_select 0, %s6, %s4
  $region1: #{bigram_cell_apply.1} parent=0
    #allocation2 [shape = 'u8[4096]{0}', space=vmem, size = 0x1000, scoped, tag = 'input window, operand 0, single buffered']
    #allocation3 [shape = 's32[1]{0}', space=sflag, size = 0x4, scoped, tag = 'scoped memory for bigram_cell_apply.1']
    #allocation4 [shape = 's32[1]{0}', space=sflag, size = 0x4, scoped, tag = 'scoped memory for bigram_cell_apply.1']
    #allocation5 [shape = 'u8[8192]{0}', space=vmem, size = 0x2000, scoped, tag = 'input window, operand 1, single buffered']
    #allocation6 [shape = 's32[1]{0}', space=sflag, size = 0x4, scoped, tag = 'scoped memory for bigram_cell_apply.1']
    #allocation7 [shape = 'u8[4096]{0}', space=vmem, size = 0x1000, scoped, tag = 'output window, operand 0, single buffered']
    %8 = vsyncpa [#allocation3], 0
    %9 = vsyncpa [#allocation6], 0
    %10 = vsyncpa [#allocation4], 0
    // Predicated region
    $region2: #{bigram_cell_apply.1} parent=1 // pred_check
      _
    $region3: #{bigram_cell_apply.1} parent=1 // pred_check_branch
      %12 = sbr.rel (0) target = $region5
    $region4: #{bigram_cell_apply.1} parent=1 // pred_region
      %s14 = ssub.s32 128, 128
      %15 = vsyncadd [#allocation3], %s14
      %s17 = sshll.u32 [#allocation2], 4
      %s18 = int_to_ptr.vmem [resolvable:$true] %s17
      %20 = dma.hbm_to_vmem [thread:$0]  %s0, 128, %s18, [#allocation3]
    $region5: #{bigram_cell_apply.1} parent=1 // pred_fallthru
      _
    // Predicated region
    $region6: #{bigram_cell_apply.1} parent=1 // pred_check
      _
    $region7: #{bigram_cell_apply.1} parent=1 // pred_check_branch
      %22 = sbr.rel (0) target = $region9
    $region8: #{bigram_cell_apply.1} parent=1 // pred_region
      %s24 = ssub.s32 256, 256
      %25 = vsyncadd [#allocation6], %s24
      %s26 = sshll.u32 [#allocation5], 4
      %s27 = int_to_ptr.vmem [resolvable:$true] %s26
      %32 = dma.hbm_to_vmem [thread:$0]  %s1, 256, %s27, [#allocation6], 128, 128, 8
    $region9: #{bigram_cell_apply.1} parent=1 // pred_fallthru
      _
    // Predicated region
    $region10: #{bigram_cell_apply.1} parent=1 // pred_check
      _
    $region11: #{bigram_cell_apply.1} parent=1 // pred_check_branch
      %34 = sbr.rel (0) target = $region13
    $region12: #{bigram_cell_apply.1} parent=1 // pred_region
      _
    $region13: #{bigram_cell_apply.1} parent=1 // pred_fallthru
      _
    // Predicated region
    $region14: #{bigram_cell_apply.1} parent=1 // pred_check
      _
    $region15: #{bigram_cell_apply.1} parent=1 // pred_check_branch
      %36 = sbr.rel (0) target = $region17
    $region16: #{bigram_cell_apply.1} parent=1 // pred_region
      %37 = dma.done [#allocation3], 128
    $region17: #{bigram_cell_apply.1} parent=1 // pred_fallthru
      _
    // Predicated region
    $region18: #{bigram_cell_apply.1} parent=1 // pred_check
      _
    $region19: #{bigram_cell_apply.1} parent=1 // pred_check_branch
      %39 = sbr.rel (0) target = $region21
    $region20: #{bigram_cell_apply.1} parent=1 // pred_region
      %40 = dma.done [#allocation6], 256
    $region21: #{bigram_cell_apply.1} parent=1 // pred_fallthru
      _
    %v41 = vld [vmem:[#allocation2] sm:$0xff]
    %v42 = vld [vmem:[#allocation5] sm:$0xff]
    %v43 = vld [vmem:[#allocation5 + $0x8] sm:$0xff]
    %v44 = vld [vmem:[%s2] sm:$0x1]
    %v46 = vlaneseq
    %v47 = vshrl.u32 %v46, 7
    %v48 = vsub.s32 0, %v47
    %v49 = vrot.slane %v44, %v48
    %vm51 = vcmask 130048
    %v53 = vsel %vm51, %v41, 0
    %55 = vmatprep.subr.mxu0 0.0
    %56 = vmatpush1.msra.mxu0 %v42
    %57 = vmatprep.subr.mxu0 0.0
    %58 = vmatpush1.msra.mxu0 %v43
    %59 = vmatprep.subr.mxu0 0.0
    %60 = vmatpush1.msra.mxu0 0.0
    %61 = vmatprep.subr.mxu0 0.0
    %62 = vmatpush1.msra.mxu0 0.0
    %63 = vmatprep.subr.mxu0 0.0
    %64 = vmatpush1.msra.mxu0 0.0
    %65 = vmatprep.subr.mxu0 0.0
    %66 = vmatpush1.msra.mxu0 0.0
    %67 = vmatprep.subr.mxu0 0.0
    %68 = vmatpush1.msra.mxu0 0.0
    %69 = vmatprep.subr.mxu0 0.0
    %70 = vmatpush1.msra.mxu0 0.0
    %71 = vmatprep.subr.mxu0 0.0
    %72 = vmatpush1.msra.mxu0 0.0
    %73 = vmatprep.subr.mxu0 0.0
    %74 = vmatpush1.msra.mxu0 0.0
    %75 = vmatprep.subr.mxu0 0.0
    %76 = vmatpush1.msra.mxu0 0.0
    %77 = vmatprep.subr.mxu0 0.0
    %78 = vmatpush1.msra.mxu0 0.0
    %79 = vmatprep.subr.mxu0 0.0
    %80 = vmatpush1.msra.mxu0 0.0
    %81 = vmatprep.subr.mxu0 0.0
    %82 = vmatpush1.msra.mxu0 0.0
    %83 = vmatprep.subr.mxu0 0.0
    %84 = vmatpush1.msra.mxu0 0.0
    %85 = vmatprep.subr.mxu0 0.0
    %86 = vmatpush1.msra.mxu0 0.0
    %87 = vmatprep.subr.mxu0 0.0
    %88 = vmatpush1.msra.mxu0 0.0
    %89 = vmatprep.subr.mxu0 0.0
    %90 = vmatpush1.msra.mxu0 0.0
    %91 = vmatprep.subr.mxu0 0.0
    %92 = vmatpush1.msra.mxu0 0.0
    %93 = vmatprep.subr.mxu0 0.0
    %94 = vmatpush1.msra.mxu0 0.0
    %95 = vmatprep.subr.mxu0 0.0
    %96 = vmatpush1.msra.mxu0 0.0
    %97 = vmatprep.subr.mxu0 0.0
    %98 = vmatpush1.msra.mxu0 0.0
    %99 = vmatprep.subr.mxu0 0.0
    %100 = vmatpush1.msra.mxu0 0.0
    %101 = vmatprep.subr.mxu0 0.0
    %102 = vmatpush1.msra.mxu0 0.0
    %103 = vmatprep.subr.mxu0 0.0
    %104 = vmatpush1.msra.mxu0 0.0
    %105 = vmatprep.subr.mxu0 0.0
    %106 = vmatpush1.msra.mxu0 0.0
    %107 = vmatprep.subr.mxu0 0.0
    %108 = vmatpush1.msra.mxu0 0.0
    %109 = vmatprep.subr.mxu0 0.0
    %110 = vmatpush1.msra.mxu0 0.0
    %111 = vmatprep.subr.mxu0 0.0
    %112 = vmatpush1.msra.mxu0 0.0
    %113 = vmatprep.subr.mxu0 0.0
    %114 = vmatpush1.msra.mxu0 0.0
    %115 = vmatprep.subr.mxu0 0.0
    %116 = vmatpush1.msra.mxu0 0.0
    %117 = vmatprep.subr.mxu0 0.0
    %118 = vmatpush1.msra.mxu0 0.0
    %119 = vmatprep.mubr.f32.mxu0 0.0
    %120 = vmatmul.mubr.f32.gmra.mrb[0].mxu0 %v53
    %v121 = vpop.f32.mrb[0].mxu0
    %v122 = vadd.f32 %v49, %v121
    %v123 = vpop.f32.mrb[0].mxu0
    %124 = vdwg.mxu0
    %v125 = vxor.u32 %v122, 2147483648
    %v126 = vmul.f32 %v125, 1.442695
    %v127 = vpow.pop %v126
    %v128 = vadd.f32 %v127, 1.0
    %v129 = vrcp.pop %v128
    %v130 = vmul.f32 1.0, %v129
    %131 = vst [vmem:[#allocation7] sm:$0xff] %v130
    // Predicated region
    $region22: #{bigram_cell_apply.1} parent=1 // pred_check
      _
    $region23: #{bigram_cell_apply.1} parent=1 // pred_check_branch
      %133 = sbr.rel (0) target = $region25
    $region24: #{bigram_cell_apply.1} parent=1 // pred_region
      %s135 = ssub.s32 128, 128
      %136 = vsyncadd [#allocation4], %s135
      %s138 = sshll.u32 [#allocation7], 4
      %s139 = int_to_ptr.vmem [resolvable:$true] %s138
      %141 = dma.vmem_to_hbm [thread:$0]  %s139, 128, %s3, [#allocation4]
    $region25: #{bigram_cell_apply.1} parent=1 // pred_fallthru
      _
    // Predicated region
    $region26: #{bigram_cell_apply.1} parent=1 // pred_check
      _
    $region27: #{bigram_cell_apply.1} parent=1 // pred_check_branch
      %143 = sbr.rel (0) target = $region29
    $region28: #{bigram_cell_apply.1} parent=1 // pred_region
      %144 = dma.done [#allocation4], 128
    $region29: #{bigram_cell_apply.1} parent=1 // pred_fallthru
      _
    %145 = vsyncpa [#allocation3], 1
    %146 = vsyncpa [#allocation6], 1
    %147 = vsyncpa [#allocation4], 1

</llo_original>
